<compile_context>
chip_gen: v6e
topology: v6e:2x2x1
jax: 0.10.0
libtpu: 0.0.40
codegen_flags: <defaults>
</compile_context>

<pallas_src>
import jax
import jax.numpy as jnp
from jax.experimental import pallas as pl
from jax.experimental.pallas import tpu as pltpu


def _mlp_kernel(x_ref, w1_ref, b1_ref, w2_ref, b2_ref, w3_ref, b3_ref, out_ref):
    """One batch tile: three MXU matmuls fused with f32 bias-add + ReLU (VPU)."""
    x = x_ref[...].astype(w1_ref.dtype)
    h1 = jnp.dot(x, w1_ref[...], preferred_element_type=jnp.float32) + b1_ref[...]
    h1 = jnp.maximum(h1, 0.0)
    h2 = (
        jnp.dot(h1.astype(w2_ref.dtype), w2_ref[...],
                preferred_element_type=jnp.float32)
        + b2_ref[...]
    )
    h2 = jnp.maximum(h2, 0.0)
    out = (
        jnp.dot(h2.astype(w3_ref.dtype), w3_ref[...],
                preferred_element_type=jnp.float32)
        + b3_ref[...]
    )
    out_ref[...] = out.astype(out_ref.dtype)


def _round_up(x, m):
    return ((x + m - 1) // m) * m


def _choose_tb(batch, block_b):
    """Pick the batch-tile size.

    * batch <= 256: a single full-batch block (block dim == array dim, allowed
      by the (8,128) rule) -> no padding, one grid step.
    * batch  > 256: spread the batch evenly over the minimum number of tiles
      (at least 2, so the two v7x TensorCores both get work), 128-row aligned
      (v5e's 128-wide MXU needs no 256 alignment; kernel is HBM-bound anyway).
      The last tile may be ragged - Pallas handles it.
    """
    if batch <= 256:
        return batch
    block_b = max(128, (block_b // 128) * 128)
    n_tiles = max(pl.cdiv(batch, block_b), 2)
    return min(_round_up(pl.cdiv(batch, n_tiles), 128), block_b)


def stringart_rl_forward(state, params, *, block_b=1024):
    """Fused forward pass of StringArtRLModel.

    state:  (B, state_size) float32.
    params: (w1, b1, w2, b2, w3, b3) with w* shaped (in, out) and b* (1, out).
            Pass the output of `prepare_params` (bf16 weights) for inference.
    """
    w1, b1, w2, b2, w3, b3 = params
    B, state_size = state.shape
    action_size = w3.shape[1]
    hidden1, hidden2 = w1.shape[1], w2.shape[1]

    tb = _choose_tb(B, block_b)
    grid = (pl.cdiv(B, tb),)

    # Advisory cost hint (exact: no padded rows / lanes are moved).
    flops = 2 * B * (state_size * hidden1 + hidden1 * hidden2 + hidden2 * action_size)
    bytes_accessed = (
        state.size * state.dtype.itemsize
        + sum(a.size * a.dtype.itemsize for a in (w1, b1, w2, b2, w3, b3))
        + B * action_size * 4
    )
    cost = pl.CostEstimate(flops=flops, transcendentals=0,
                           bytes_accessed=bytes_accessed)

    # Activations / outputs stream over the batch grid; weights stay resident.
    act_spec = pl.BlockSpec((tb, state_size), lambda i: (i, 0))
    out_spec = pl.BlockSpec((tb, action_size), lambda i: (i, 0))

    def resident(arr):
        return pl.BlockSpec(arr.shape, lambda i: (0, 0))

    out = pl.pallas_call(
        _mlp_kernel,
        out_shape=jax.ShapeDtypeStruct((B, action_size), jnp.float32),
        grid=grid,
        in_specs=[
            act_spec,
            resident(w1), resident(b1),
            resident(w2), resident(b2),
            resident(w3), resident(b3),
        ],
        out_specs=out_spec,
        compiler_params=pltpu.CompilerParams(
            dimension_semantics=("parallel",),
            vmem_limit_bytes=32 * 1024 * 1024,
        ),
        cost_estimate=cost,
    )(state, w1, b1, w2, b2, w3, b3)

    return out


def init_params(key, state_size, action_size):
    """Deterministic f32 init matching nn.Linear (weights stored as (in, out))."""
    k1, k2, k3, k4, k5, k6 = jax.random.split(key, 6)

    def linear_init(kw, kb, fan_in, fan_out):
        # PyTorch default: U(-1/sqrt(fan_in), 1/sqrt(fan_in))
        bound = 1.0 / jnp.sqrt(jnp.float32(fan_in))
        w = jax.random.uniform(kw, (fan_in, fan_out), jnp.float32, -bound, bound)
        b = jax.random.uniform(kb, (1, fan_out), jnp.float32, -bound, bound)
        return w, b

    w1, b1 = linear_init(k1, k2, state_size, 256)
    w2, b2 = linear_init(k3, k4, 256, 128)
    w3, b3 = linear_init(k5, k6, 128, action_size)
    return (w1, b1, w2, b2, w3, b3)


def prepare_params(params, weights_dtype=jnp.bfloat16):
    """One-time weight cast for the hot inference loop (bf16 MXU fast path).

    Biases stay f32: bias-add / ReLU run on the VPU in f32 and accumulation is
    already forced to f32 inside the kernel.
    """
    w1, b1, w2, b2, w3, b3 = params
    if weights_dtype is None:
        return params
    return (w1.astype(weights_dtype), b1,
            w2.astype(weights_dtype), b2,
            w3.astype(weights_dtype), b3)


def reference_forward(state, params):
    w1, b1, w2, b2, w3, b3 = params
    hi = jax.lax.Precision.HIGHEST
    h1 = jnp.maximum(jnp.dot(state, w1, precision=hi) + b1, 0.0)
    h2 = jnp.maximum(jnp.dot(h1, w2, precision=hi) + b2, 0.0)
    return jnp.dot(h2, w3, precision=hi) + b3


if __name__ == "__main__":
    key = jax.random.PRNGKey(0)
    k_params, k_state_small, k_state_big = jax.random.split(key, 3)

    state_size = 64
    action_size = 32
    params_f32 = init_params(k_params, state_size, action_size)
    params = prepare_params(params_f32)  # bf16 weights: default inference path

    # --- Small batch: single full-batch tile, bf16 weights ---
    batch = 8
    state = jax.random.normal(k_state_small, (batch, state_size), jnp.float32)
    ref = reference_forward(state, params_f32)

    out = jax.block_until_ready(stringart_rl_forward(state, params))
    assert out.shape == (batch, action_size), out.shape
    assert jnp.allclose(out, ref, atol=5e-2, rtol=5e-2), "bf16 small-batch mismatch"

    # --- Same batch, f32 weights (tighter tolerance sanity check) ---
    out_f32 = jax.block_until_ready(stringart_rl_forward(state, params_f32))
    assert jnp.allclose(out_f32, ref, atol=5e-3, rtol=5e-3), "f32 small-batch mismatch"

    # --- Multi-tile ragged path: B=300 with block_b=128 -> grid of 3 tiles,
    #     last tile has 44 valid rows (no wrapper pad / slice). ---
    big_batch = 300
    state_big = jax.random.normal(k_state_big, (big_batch, state_size), jnp.float32)
    ref_big = reference_forward(state_big, params_f32)

    out_big = jax.block_until_ready(
        stringart_rl_forward(state_big, params, block_b=128)
    )
    assert out_big.shape == (big_batch, action_size), out_big.shape
    assert jnp.allclose(out_big, ref_big, atol=5e-2, rtol=5e-2), "tiled mismatch"

    # --- Default block_b: B=300 splits into 2 x 256-row tiles (both v7x TCs) ---
    out_big2 = jax.block_until_ready(stringart_rl_forward(state_big, params))
    assert jnp.allclose(out_big2, ref_big, atol=5e-2, rtol=5e-2), "2-tile mismatch"

    print("KERNEL_OK")
</pallas_src>

<mosaic_0001>
module attributes {stable_mosaic.version = 11 : i64} {
  func.func @_mlp_kernel(%arg0: i32, %arg1: memref<8x64xf32, #tpu.memory_space<vmem>>, %arg2: memref<64x256xbf16, #tpu.memory_space<vmem>>, %arg3: memref<1x256xf32, #tpu.memory_space<vmem>>, %arg4: memref<256x128xbf16, #tpu.memory_space<vmem>>, %arg5: memref<1x128xf32, #tpu.memory_space<vmem>>, %arg6: memref<128x32xbf16, #tpu.memory_space<vmem>>, %arg7: memref<1x32xf32, #tpu.memory_space<vmem>>, %arg8: memref<8x32xf32, #tpu.memory_space<vmem>>) attributes {dimension_semantics = [#tpu.dimension_semantics<parallel>], iteration_bounds = array<i64: 1>, scalar_prefetch = 0 : i64, scratch_operands = 0 : i64, tpu.core_type = #tpu.core_type<tc>, window_params = [{transform_indices = @transform_0, window_bounds = array<i64: 8, 64>}, {pipeline_mode = #tpu.pipeline_mode<synchronous>, transform_indices = @transform_1, window_bounds = array<i64: 64, 256>}, {pipeline_mode = #tpu.pipeline_mode<synchronous>, transform_indices = @transform_2, window_bounds = array<i64: 1, 256>}, {pipeline_mode = #tpu.pipeline_mode<synchronous>, transform_indices = @transform_3, window_bounds = array<i64: 256, 128>}, {pipeline_mode = #tpu.pipeline_mode<synchronous>, transform_indices = @transform_4, window_bounds = array<i64: 1, 128>}, {pipeline_mode = #tpu.pipeline_mode<synchronous>, transform_indices = @transform_5, window_bounds = array<i64: 128, 32>}, {pipeline_mode = #tpu.pipeline_mode<synchronous>, transform_indices = @transform_6, window_bounds = array<i64: 1, 32>}, {transform_indices = @transform_7, window_bounds = array<i64: 8, 32>}]} {
    %c0 = arith.constant 0 : index
    %c0_0 = arith.constant 0 : index
    %0 = vector.load %arg1[%c0, %c0_0] : memref<8x64xf32, #tpu.memory_space<vmem>>, vector<8x64xf32>
    %1 = arith.truncf %0 : vector<8x64xf32> to vector<8x64xbf16>
    %c0_1 = arith.constant 0 : index
    %c0_2 = arith.constant 0 : index
    %2 = vector.load %arg2[%c0_1, %c0_2] : memref<64x256xbf16, #tpu.memory_space<vmem>>, vector<64x256xbf16>
    %cst = arith.constant dense<0.000000e+00> : vector<8x256xf32>
    %3 = tpu.matmul %1, %2, %cst {dimension_numbers = #tpu.dot_dimension_numbers<[1], [0], [0], [1], [0, 0, 1, 1], [], []>} : vector<8x64xbf16>, vector<64x256xbf16>, vector<8x256xf32> -> vector<8x256xf32>
    %c0_3 = arith.constant 0 : index
    %c0_4 = arith.constant 0 : index
    %4 = vector.load %arg3[%c0_3, %c0_4] : memref<1x256xf32, #tpu.memory_space<vmem>>, vector<1x256xf32>
    %5 = vector.broadcast %4 : vector<1x256xf32> to vector<8x256xf32>
    %6 = arith.addf %3, %5 : vector<8x256xf32>
    %cst_5 = arith.constant 0.000000e+00 : f32
    %7 = vector.broadcast %cst_5 : f32 to vector<8x256xf32>
    %8 = arith.maximumf %6, %7 : vector<8x256xf32>
    %9 = arith.truncf %8 : vector<8x256xf32> to vector<8x256xbf16>
    %c0_6 = arith.constant 0 : index
    %c0_7 = arith.constant 0 : index
    %10 = vector.load %arg4[%c0_6, %c0_7] : memref<256x128xbf16, #tpu.memory_space<vmem>>, vector<256x128xbf16>
    %cst_8 = arith.constant dense<0.000000e+00> : vector<8x128xf32>
    %11 = tpu.matmul %9, %10, %cst_8 {dimension_numbers = #tpu.dot_dimension_numbers<[1], [0], [0], [1], [0, 0, 1, 1], [], []>} : vector<8x256xbf16>, vector<256x128xbf16>, vector<8x128xf32> -> vector<8x128xf32>
    %c0_9 = arith.constant 0 : index
    %c0_10 = arith.constant 0 : index
    %12 = vector.load %arg5[%c0_9, %c0_10] : memref<1x128xf32, #tpu.memory_space<vmem>>, vector<1x128xf32>
    %13 = vector.broadcast %12 : vector<1x128xf32> to vector<8x128xf32>
    %14 = arith.addf %11, %13 : vector<8x128xf32>
    %cst_11 = arith.constant 0.000000e+00 : f32
    %15 = vector.broadcast %cst_11 : f32 to vector<8x128xf32>
    %16 = arith.maximumf %14, %15 : vector<8x128xf32>
    %17 = arith.truncf %16 : vector<8x128xf32> to vector<8x128xbf16>
    %c0_12 = arith.constant 0 : index
    %c0_13 = arith.constant 0 : index
    %18 = vector.load %arg6[%c0_12, %c0_13] : memref<128x32xbf16, #tpu.memory_space<vmem>>, vector<128x32xbf16>
    %cst_14 = arith.constant dense<0.000000e+00> : vector<8x32xf32>
    %19 = tpu.matmul %17, %18, %cst_14 {dimension_numbers = #tpu.dot_dimension_numbers<[1], [0], [0], [1], [0, 0, 1, 1], [], []>} : vector<8x128xbf16>, vector<128x32xbf16>, vector<8x32xf32> -> vector<8x32xf32>
    %c0_15 = arith.constant 0 : index
    %c0_16 = arith.constant 0 : index
    %20 = vector.load %arg7[%c0_15, %c0_16] : memref<1x32xf32, #tpu.memory_space<vmem>>, vector<1x32xf32>
    %21 = vector.broadcast %20 : vector<1x32xf32> to vector<8x32xf32>
    %22 = arith.addf %19, %21 : vector<8x32xf32>
    %c0_17 = arith.constant 0 : index
    %c0_18 = arith.constant 0 : index
    %23 = vector.load %arg8[%c0_17, %c0_18] : memref<8x32xf32, #tpu.memory_space<vmem>>, vector<8x32xf32>
    tpu.vector_store %arg8[%c0_17, %c0_18], %22 {strides = array<i32>} : memref<8x32xf32, #tpu.memory_space<vmem>>, vector<8x32xf32>,
    return
  }
  func.func @transform_0(%arg0: i32) -> (i32, i32) {
    %c0_i32 = arith.constant 0 : i32
    %c0_i32_0 = arith.constant 0 : i32
    return %arg0, %c0_i32 : i32, i32
  }
  func.func @transform_1(%arg0: i32) -> (i32, i32) {
    %c0_i32 = arith.constant 0 : i32
    %c0_i32_0 = arith.constant 0 : i32
    %c0_i32_1 = arith.constant 0 : i32
    return %c0_i32, %c0_i32_0 : i32, i32
  }
  func.func @transform_2(%arg0: i32) -> (i32, i32) {
    %c0_i32 = arith.constant 0 : i32
    %c0_i32_0 = arith.constant 0 : i32
    %c0_i32_1 = arith.constant 0 : i32
    return %c0_i32, %c0_i32_0 : i32, i32
  }
  func.func @transform_3(%arg0: i32) -> (i32, i32) {
    %c0_i32 = arith.constant 0 : i32
    %c0_i32_0 = arith.constant 0 : i32
    %c0_i32_1 = arith.constant 0 : i32
    return %c0_i32, %c0_i32_0 : i32, i32
  }
  func.func @transform_4(%arg0: i32) -> (i32, i32) {
    %c0_i32 = arith.constant 0 : i32
    %c0_i32_0 = arith.constant 0 : i32
    %c0_i32_1 = arith.constant 0 : i32
    return %c0_i32, %c0_i32_0 : i32, i32
  }
  func.func @transform_5(%arg0: i32) -> (i32, i32) {
    %c0_i32 = arith.constant 0 : i32
    %c0_i32_0 = arith.constant 0 : i32
    %c0_i32_1 = arith.constant 0 : i32
    return %c0_i32, %c0_i32_0 : i32, i32
  }
  func.func @transform_6(%arg0: i32) -> (i32, i32) {
    %c0_i32 = arith.constant 0 : i32
    %c0_i32_0 = arith.constant 0 : i32
    %c0_i32_1 = arith.constant 0 : i32
    return %c0_i32, %c0_i32_0 : i32, i32
  }
  func.func @transform_7(%arg0: i32) -> (i32, i32) {
    %c0_i32 = arith.constant 0 : i32
    %c0_i32_0 = arith.constant 0 : i32
    return %arg0, %c0_i32 : i32, i32
  }
}

</mosaic_0001>

<llo_original>
// kernel: tpu_custom_call.1
$region0: #{tpu_custom_call.1}
  #allocation0 [shape = 'u32[]', space=smem, size = 0x4, offset = 0x4, fixed_abs, tag = 'smem constant byte address 0x4 - core index']
  #allocation1 [shape = 'u32[144,128]{1,0:T(1,128)}', space=vmem, size = 0x12000, scoped, tag = 'internal scratch']
  %s0 = inlined_call_operand.vmem [shape: f32[8,64], index: 0, kind: input, shape index: {}]
  %s1 = inlined_call_operand.vmem [shape: bf16[64,256], index: 1, kind: input, shape index: {}]
  %s2 = inlined_call_operand.vmem [shape: f32[1,256], index: 2, kind: input, shape index: {}]
  %s3 = inlined_call_operand.hbm [shape: bf16[256,128], index: 3, kind: input, shape index: {}]
  %s4 = inlined_call_operand.vmem [shape: f32[1,128], index: 4, kind: input, shape index: {}]
  %s5 = inlined_call_operand.vmem [shape: bf16[128,32], index: 5, kind: input, shape index: {}]
  %s6 = inlined_call_operand.vmem [shape: f32[1,32], index: 6, kind: input, shape index: {}]
  %s7 = inlined_call_operand.hbm [shape: f32[8,32], index: 7, kind: output, shape index: {}]
  %s8 = sld [smem:[#allocation0]]
  $region42: #{tpu_custom_call.1} parent=0
    _
  %s10 = ssub.s32 1, %s8
  %s11 = scalar_select 0, %s10, %s8
  $region1: #{tpu_custom_call.1} parent=0
    #allocation2 [shape = 'u8[65536]{0}', space=vmem, size = 0x10000, scoped, tag = 'input window, operand 3, single buffered']
    #allocation3 [shape = 's32[1]{0}', space=sflag, size = 0x4, scoped, tag = 'scoped memory for tpu_custom_call.1']
    #allocation4 [shape = 's32[1]{0}', space=sflag, size = 0x4, scoped, tag = 'scoped memory for tpu_custom_call.1']
    #allocation5 [shape = 'u8[4096]{0}', space=vmem, size = 0x1000, scoped, tag = 'output window, operand 0, single buffered']
    %12 = vsyncpa [#allocation3], 0
    %13 = vsyncpa [#allocation4], 0
    // Predicated region
    $region2: #{tpu_custom_call.1} parent=1 // pred_check
      _
    $region3: #{tpu_custom_call.1} parent=1 // pred_check_branch
      %15 = sbr.rel (0) target = $region5
    $region4: #{tpu_custom_call.1} parent=1 // pred_region
      _
    $region5: #{tpu_custom_call.1} parent=1 // pred_fallthru
      _
    // Predicated region
    $region6: #{tpu_custom_call.1} parent=1 // pred_check
      _
    $region7: #{tpu_custom_call.1} parent=1 // pred_check_branch
      %17 = sbr.rel (0) target = $region9
    $region8: #{tpu_custom_call.1} parent=1 // pred_region
      _
    $region9: #{tpu_custom_call.1} parent=1 // pred_fallthru
      _
    // Predicated region
    $region10: #{tpu_custom_call.1} parent=1 // pred_check
      _
    $region11: #{tpu_custom_call.1} parent=1 // pred_check_branch
      %19 = sbr.rel (0) target = $region13
    $region12: #{tpu_custom_call.1} parent=1 // pred_region
      _
    $region13: #{tpu_custom_call.1} parent=1 // pred_fallthru
      _
    // Predicated region
    $region14: #{tpu_custom_call.1} parent=1 // pred_check
      _
    $region15: #{tpu_custom_call.1} parent=1 // pred_check_branch
      %21 = sbr.rel (0) target = $region17
    $region16: #{tpu_custom_call.1} parent=1 // pred_region
      %s23 = ssub.s32 2048, 2048
      %24 = vsyncadd [#allocation3], %s23
      %s25 = sshll.u32 [#allocation2], 4
      %s26 = int_to_ptr.vmem [resolvable:$true] %s25
      %31 = dma.hbm_to_vmem [thread:$0]  %s3, 2048, %s26, [#allocation3], 64, 64, 4
    $region17: #{tpu_custom_call.1} parent=1 // pred_fallthru
      _
    // Predicated region
    $region18: #{tpu_custom_call.1} parent=1 // pred_check
      _
    $region19: #{tpu_custom_call.1} parent=1 // pred_check_branch
      %33 = sbr.rel (0) target = $region21
    $region20: #{tpu_custom_call.1} parent=1 // pred_region
      _
    $region21: #{tpu_custom_call.1} parent=1 // pred_fallthru
      _
    // Predicated region
    $region22: #{tpu_custom_call.1} parent=1 // pred_check
      _
    $region23: #{tpu_custom_call.1} parent=1 // pred_check_branch
      %35 = sbr.rel (0) target = $region25
    $region24: #{tpu_custom_call.1} parent=1 // pred_region
      _
    $region25: #{tpu_custom_call.1} parent=1 // pred_fallthru
      _
    // Predicated region
    $region26: #{tpu_custom_call.1} parent=1 // pred_check
      _
    $region27: #{tpu_custom_call.1} parent=1 // pred_check_branch
      %37 = sbr.rel (0) target = $region29
    $region28: #{tpu_custom_call.1} parent=1 // pred_region
      _
    $region29: #{tpu_custom_call.1} parent=1 // pred_fallthru
      _
    // Predicated region
    $region30: #{tpu_custom_call.1} parent=1 // pred_check
      _
    $region31: #{tpu_custom_call.1} parent=1 // pred_check_branch
      %39 = sbr.rel (0) target = $region33
    $region32: #{tpu_custom_call.1} parent=1 // pred_region
      %40 = dma.done [#allocation3], 2048
    $region33: #{tpu_custom_call.1} parent=1 // pred_fallthru
      _
    %v42 = vld [vmem:[%s0] sm:$0xff]
    %v43 = vpack.c.bf16 %v42, %v42
    %v44 = vld [vmem:[%s1] sm:$0xff]
    %v45 = vld [vmem:[%s1 + $0x8] sm:$0xff]
    %v46 = vld [vmem:[%s1 + $0x10] sm:$0xff]
    %v47 = vld [vmem:[%s1 + $0x18] sm:$0xff]
    %v48 = vld [vmem:[%s1 + $0x20] sm:$0xff]
    %v49 = vld [vmem:[%s1 + $0x28] sm:$0xff]
    %v50 = vld [vmem:[%s1 + $0x30] sm:$0xff]
    %v51 = vld [vmem:[%s1 + $0x38] sm:$0xff]
    %v52 = vld [vmem:[%s2] sm:$0x3]
    %v54 = vlaneseq
    %v55 = vshrl.u32 %v54, 7
    %v56 = vsub.s32 0, %v55
    %v57 = vrot.slane %v52, %v56
    %v58 = vlaneseq
    %v59 = vshrl.u32 %v58, 7
    %v60 = vsub.s32 1, %v59
    %v61 = vrot.slane %v52, %v60
    %v72 = vunpack.c.l.b16 %v44
    %v73 = vunpack.c.h.b16 %v44
    %v74 = vunpack.c.l.b16 %v45
    %v75 = vunpack.c.h.b16 %v45
    %v76 = vunpack.c.l.b16 %v46
    %v77 = vunpack.c.h.b16 %v46
    %v78 = vunpack.c.l.b16 %v47
    %v79 = vunpack.c.h.b16 %v47
    %v80 = vunpack.c.l.b16 %v48
    %v81 = vunpack.c.h.b16 %v48
    %v82 = vunpack.c.l.b16 %v49
    %v83 = vunpack.c.h.b16 %v49
    %v84 = vunpack.c.l.b16 %v50
    %v85 = vunpack.c.h.b16 %v50
    %v86 = vunpack.c.l.b16 %v51
    %v87 = vunpack.c.h.b16 %v51
    %v88 = vpack.c.b16 %v74, %v72
    %v89 = vpack.c.b16 %v75, %v73
    %v90 = vpack.c.b16 %v78, %v76
    %v91 = vpack.c.b16 %v79, %v77
    %v92 = vpack.c.b16 %v82, %v80
    %v93 = vpack.c.b16 %v83, %v81
    %v94 = vpack.c.b16 %v86, %v84
    %v95 = vpack.c.b16 %v87, %v85
    %vm104 = vcmask 523264
    %v106 = vsel %vm104, %v43, 0
    %108 = vmatprep.subr.bf16.mxu0 0
    %109 = vmatpush1.bf16.msra.mxu0 0
    %110 = vmatprep.subr.bf16.mxu0 0
    %111 = vmatpush1.bf16.msra.mxu0 0
    %112 = vmatprep.subr.bf16.mxu0 0
    %113 = vmatpush1.bf16.msra.mxu0 0
    %114 = vmatprep.subr.bf16.mxu0 0
    %115 = vmatpush1.bf16.msra.mxu0 0
    %116 = vmatprep.subr.bf16.mxu0 %v95
    %117 = vmatpush1.bf16.msra.mxu0 %v94
    %118 = vmatprep.subr.bf16.mxu0 %v93
    %119 = vmatpush1.bf16.msra.mxu0 %v92
    %120 = vmatprep.subr.bf16.mxu0 %v91
    %121 = vmatpush1.bf16.msra.mxu0 %v90
    %122 = vmatprep.subr.bf16.mxu0 %v89
    %123 = vmatpush1.bf16.msra.mxu0 %v88
    %124 = vmatprep.subr.bf16.mxu0 0
    %125 = vmatpush2.bf16.msra.mxu0 0
    %126 = vmatprep.subr.bf16.mxu0 0
    %127 = vmatpush2.bf16.msra.mxu0 0
    %128 = vmatprep.subr.bf16.mxu0 0
    %129 = vmatpush2.bf16.msra.mxu0 0
    %130 = vmatprep.subr.bf16.mxu0 0
    %131 = vmatpush2.bf16.msra.mxu0 0
    %132 = vmatprep.subr.bf16.mxu0 0
    %133 = vmatpush2.bf16.msra.mxu0 0
    %134 = vmatprep.subr.bf16.mxu0 0
    %135 = vmatpush2.bf16.msra.mxu0 0
    %136 = vmatprep.subr.bf16.mxu0 0
    %137 = vmatpush2.bf16.msra.mxu0 0
    %138 = vmatprep.subr.bf16.mxu0 0
    %139 = vmatpush2.bf16.msra.mxu0 0
    %140 = vmatprep.mubr.bf16.mxu0 0
    %141 = vmatmul.mubr.bf16.gmra.mxu0 %v106
    %v142 = vpop.f32.mrf.mxu0
    %v143 = vadd.f32 %v57, %v142
    %v144 = vpop.f32.mrf.mxu0
    %v145 = vadd.f32 %v61, %v144
    %v146 = vpop.f32.mrf.mxu0
    %v147 = vpop.f32.mrf.mxu0
    %148 = vdwg.mxu0
    %v149 = vmax.f32 %v143, 0.0
    %v150 = vmax.f32 %v145, 0.0
    %v151 = vpack.c.bf16 %v149, %v149
    %v152 = vpack.c.bf16 %v150, %v150
    %v153 = vld [vmem:[#allocation2] sm:$0xf]
    %v154 = vld [vmem:[#allocation2 + $0x4] sm:$0xf]
    %v155 = vld [vmem:[#allocation2 + $0x8] sm:$0xf]
    %v156 = vld [vmem:[#allocation2 + $0xc] sm:$0xf]
    %v157 = vld [vmem:[#allocation2 + $0x10] sm:$0xf]
    %v158 = vld [vmem:[#allocation2 + $0x14] sm:$0xf]
    %v159 = vld [vmem:[#allocation2 + $0x18] sm:$0xf]
    %v160 = vld [vmem:[#allocation2 + $0x1c] sm:$0xf]
    %v161 = vld [vmem:[#allocation2 + $0x20] sm:$0xf]
    %v162 = vld [vmem:[#allocation2 + $0x24] sm:$0xf]
    %v163 = vld [vmem:[#allocation2 + $0x28] sm:$0xf]
    %v164 = vld [vmem:[#allocation2 + $0x2c] sm:$0xf]
    %v165 = vld [vmem:[#allocation2 + $0x30] sm:$0xf]
    %v166 = vld [vmem:[#allocation2 + $0x34] sm:$0xf]
    %v167 = vld [vmem:[#allocation2 + $0x38] sm:$0xf]
    %v168 = vld [vmem:[#allocation2 + $0x3c] sm:$0xf]
    %v169 = vld [vmem:[#allocation2 + $0x40] sm:$0xf]
    %v170 = vld [vmem:[#allocation2 + $0x44] sm:$0xf]
    %v171 = vld [vmem:[#allocation2 + $0x48] sm:$0xf]
    %v172 = vld [vmem:[#allocation2 + $0x4c] sm:$0xf]
    %v173 = vld [vmem:[#allocation2 + $0x50] sm:$0xf]
    %v174 = vld [vmem:[#allocation2 + $0x54] sm:$0xf]
    %v175 = vld [vmem:[#allocation2 + $0x58] sm:$0xf]
    %v176 = vld [vmem:[#allocation2 + $0x5c] sm:$0xf]
    %v177 = vld [vmem:[#allocation2 + $0x60] sm:$0xf]
    %v178 = vld [vmem:[#allocation2 + $0x64] sm:$0xf]
    %v179 = vld [vmem:[#allocation2 + $0x68] sm:$0xf]
    %v180 = vld [vmem:[#allocation2 + $0x6c] sm:$0xf]
    %v181 = vld [vmem:[#allocation2 + $0x70] sm:$0xf]
    %v182 = vld [vmem:[#allocation2 + $0x74] sm:$0xf]
    %v183 = vld [vmem:[#allocation2 + $0x78] sm:$0xf]
    %v184 = vld [vmem:[#allocation2 + $0x7c] sm:$0xf]
    %v185 = vld [vmem:[%s4] sm:$0x1]
    %v187 = vlaneseq
    %v188 = vshrl.u32 %v187, 7
    %v189 = vsub.s32 0, %v188
    %v190 = vrot.slane %v185, %v189
    %v224 = vunpack.c.l.b16 %v153
    %v225 = vunpack.c.l.b16 %v154
    %v226 = vunpack.c.l.b16 %v155
    %v227 = vunpack.c.l.b16 %v156
    %v228 = vunpack.c.l.b16 %v157
    %v229 = vunpack.c.l.b16 %v158
    %v230 = vunpack.c.l.b16 %v159
    %v231 = vunpack.c.l.b16 %v160
    %v232 = vunpack.c.l.b16 %v161
    %v233 = vunpack.c.l.b16 %v162
    %v234 = vunpack.c.l.b16 %v163
    %v235 = vunpack.c.l.b16 %v164
    %v236 = vunpack.c.l.b16 %v165
    %v237 = vunpack.c.l.b16 %v166
    %v238 = vunpack.c.l.b16 %v167
    %v239 = vunpack.c.l.b16 %v168
    %v240 = vunpack.c.l.b16 %v169
    %v241 = vunpack.c.l.b16 %v170
    %v242 = vunpack.c.l.b16 %v171
    %v243 = vunpack.c.l.b16 %v172
    %v244 = vunpack.c.l.b16 %v173
    %v245 = vunpack.c.l.b16 %v174
    %v246 = vunpack.c.l.b16 %v175
    %v247 = vunpack.c.l.b16 %v176
    %v248 = vunpack.c.l.b16 %v177
    %v249 = vunpack.c.l.b16 %v178
    %v250 = vunpack.c.l.b16 %v179
    %v251 = vunpack.c.l.b16 %v180
    %v252 = vunpack.c.l.b16 %v181
    %v253 = vunpack.c.l.b16 %v182
    %v254 = vunpack.c.l.b16 %v183
    %v255 = vunpack.c.l.b16 %v184
    %v256 = vpack.c.b16 %v225, %v224
    %v257 = vpack.c.b16 %v227, %v226
    %v258 = vpack.c.b16 %v229, %v228
    %v259 = vpack.c.b16 %v231, %v230
    %v260 = vpack.c.b16 %v233, %v232
    %v261 = vpack.c.b16 %v235, %v234
    %v262 = vpack.c.b16 %v237, %v236
    %v263 = vpack.c.b16 %v239, %v238
    %v264 = vpack.c.b16 %v241, %v240
    %v265 = vpack.c.b16 %v243, %v242
    %v266 = vpack.c.b16 %v245, %v244
    %v267 = vpack.c.b16 %v247, %v246
    %v268 = vpack.c.b16 %v249, %v248
    %v269 = vpack.c.b16 %v251, %v250
    %v270 = vpack.c.b16 %v253, %v252
    %v271 = vpack.c.b16 %v255, %v254
    %288 = vmatprep.subr.bf16.mxu0 0
    %289 = vmatpush1.bf16.msra.mxu0 %v263
    %290 = vmatprep.subr.bf16.mxu0 0
    %291 = vmatpush1.bf16.msra.mxu0 %v262
    %292 = vmatprep.subr.bf16.mxu0 0
    %293 = vmatpush1.bf16.msra.mxu0 %v261
    %294 = vmatprep.subr.bf16.mxu0 0
    %295 = vmatpush1.bf16.msra.mxu0 %v260
    %296 = vmatprep.subr.bf16.mxu0 0
    %297 = vmatpush1.bf16.msra.mxu0 %v259
    %298 = vmatprep.subr.bf16.mxu0 0
    %299 = vmatpush1.bf16.msra.mxu0 %v258
    %300 = vmatprep.subr.bf16.mxu0 0
    %301 = vmatpush1.bf16.msra.mxu0 %v257
    %302 = vmatprep.subr.bf16.mxu0 0
    %303 = vmatpush1.bf16.msra.mxu0 %v256
    %304 = vmatprep.subr.bf16.mxu0 0
    %305 = vmatpush2.bf16.msra.mxu0 %v271
    %306 = vmatprep.subr.bf16.mxu0 0
    %307 = vmatpush2.bf16.msra.mxu0 %v270
    %308 = vmatprep.subr.bf16.mxu0 0
    %309 = vmatpush2.bf16.msra.mxu0 %v269
    %310 = vmatprep.subr.bf16.mxu0 0
    %311 = vmatpush2.bf16.msra.mxu0 %v268
    %312 = vmatprep.subr.bf16.mxu0 0
    %313 = vmatpush2.bf16.msra.mxu0 %v267
    %314 = vmatprep.subr.bf16.mxu0 0
    %315 = vmatpush2.bf16.msra.mxu0 %v266
    %316 = vmatprep.subr.bf16.mxu0 0
    %317 = vmatpush2.bf16.msra.mxu0 %v265
    %318 = vmatprep.subr.bf16.mxu0 0
    %319 = vmatpush2.bf16.msra.mxu0 %v264
    %320 = vmatprep.mubr.bf16.mxu0 %v152
    %321 = vmatmul.mubr.bf16.gmra.mxu0 %v151
    %v322 = vpop.f32.mrf.mxu0
    %v323 = vadd.f32 %v190, %v322
    %v324 = vpop.f32.mrf.mxu0
    %v325 = vpop.f32.mrf.mxu0
    %v326 = vpop.f32.mrf.mxu0
    %327 = vdwg.mxu0
    %v328 = vmax.f32 %v323, 0.0
    %v329 = vpack.c.bf16 %v328, %v328
    %v330 = vld [vmem:[%s5] sm:$0xf]
    %v331 = vld [vmem:[%s5 + $0x4] sm:$0xf]
    %v332 = vld [vmem:[%s5 + $0x8] sm:$0xf]
    %v333 = vld [vmem:[%s5 + $0xc] sm:$0xf]
    %v334 = vld [vmem:[%s5 + $0x10] sm:$0xf]
    %v335 = vld [vmem:[%s5 + $0x14] sm:$0xf]
    %v336 = vld [vmem:[%s5 + $0x18] sm:$0xf]
    %v337 = vld [vmem:[%s5 + $0x1c] sm:$0xf]
    %v338 = vld [vmem:[%s5 + $0x20] sm:$0xf]
    %v339 = vld [vmem:[%s5 + $0x24] sm:$0xf]
    %v340 = vld [vmem:[%s5 + $0x28] sm:$0xf]
    %v341 = vld [vmem:[%s5 + $0x2c] sm:$0xf]
    %v342 = vld [vmem:[%s5 + $0x30] sm:$0xf]
    %v343 = vld [vmem:[%s5 + $0x34] sm:$0xf]
    %v344 = vld [vmem:[%s5 + $0x38] sm:$0xf]
    %v345 = vld [vmem:[%s5 + $0x3c] sm:$0xf]
    %v346 = vld [vmem:[%s6] sm:$0x1]
    %v348 = vlaneseq
    %v349 = vshrl.u32 %v348, 7
    %v350 = vsub.s32 0, %v349
    %v351 = vrot.slane %v346, %v350
    %v369 = vunpack.c.l.b16 %v330
    %v370 = vunpack.c.l.b16 %v331
    %v371 = vunpack.c.l.b16 %v332
    %v372 = vunpack.c.l.b16 %v333
    %v373 = vunpack.c.l.b16 %v334
    %v374 = vunpack.c.l.b16 %v335
    %v375 = vunpack.c.l.b16 %v336
    %v376 = vunpack.c.l.b16 %v337
    %v377 = vunpack.c.l.b16 %v338
    %v378 = vunpack.c.l.b16 %v339
    %v379 = vunpack.c.l.b16 %v340
    %v380 = vunpack.c.l.b16 %v341
    %v381 = vunpack.c.l.b16 %v342
    %v382 = vunpack.c.l.b16 %v343
    %v383 = vunpack.c.l.b16 %v344
    %v384 = vunpack.c.l.b16 %v345
    %v385 = vpack.c.b16 %v370, %v369
    %v386 = vpack.c.b16 %v372, %v371
    %v387 = vpack.c.b16 %v374, %v373
    %v388 = vpack.c.b16 %v376, %v375
    %v389 = vpack.c.b16 %v378, %v377
    %v390 = vpack.c.b16 %v380, %v379
    %v391 = vpack.c.b16 %v382, %v381
    %v392 = vpack.c.b16 %v384, %v383
    %401 = vmatprep.subr.bf16.mxu0 0
    %402 = vmatpush1.bf16.msra.mxu0 %v392
    %403 = vmatprep.subr.bf16.mxu0 0
    %404 = vmatpush1.bf16.msra.mxu0 %v391
    %405 = vmatprep.subr.bf16.mxu0 0
    %406 = vmatpush1.bf16.msra.mxu0 %v390
    %407 = vmatprep.subr.bf16.mxu0 0
    %408 = vmatpush1.bf16.msra.mxu0 %v389
    %409 = vmatprep.subr.bf16.mxu0 0
    %410 = vmatpush1.bf16.msra.mxu0 %v388
    %411 = vmatprep.subr.bf16.mxu0 0
    %412 = vmatpush1.bf16.msra.mxu0 %v387
    %413 = vmatprep.subr.bf16.mxu0 0
    %414 = vmatpush1.bf16.msra.mxu0 %v386
    %415 = vmatprep.subr.bf16.mxu0 0
    %416 = vmatpush1.bf16.msra.mxu0 %v385
    %417 = vmatprep.subr.bf16.mxu0 0
    %418 = vmatpush2.bf16.msra.mxu0 0
    %419 = vmatprep.subr.bf16.mxu0 0
    %420 = vmatpush2.bf16.msra.mxu0 0
    %421 = vmatprep.subr.bf16.mxu0 0
    %422 = vmatpush2.bf16.msra.mxu0 0
    %423 = vmatprep.subr.bf16.mxu0 0
    %424 = vmatpush2.bf16.msra.mxu0 0
    %425 = vmatprep.subr.bf16.mxu0 0
    %426 = vmatpush2.bf16.msra.mxu0 0
    %427 = vmatprep.subr.bf16.mxu0 0
    %428 = vmatpush2.bf16.msra.mxu0 0
    %429 = vmatprep.subr.bf16.mxu0 0
    %430 = vmatpush2.bf16.msra.mxu0 0
    %431 = vmatprep.subr.bf16.mxu0 0
    %432 = vmatpush2.bf16.msra.mxu0 0
    %433 = vmatprep.mubr.bf16.mxu0 0
    %434 = vmatmul.mubr.bf16.gmra.mxu0 %v329
    %v435 = vpop.f32.mrf.mxu0
    %v436 = vadd.f32 %v351, %v435
    %v437 = vpop.f32.mrf.mxu0
    %v438 = vpop.f32.mrf.mxu0
    %v439 = vpop.f32.mrf.mxu0
    %440 = vdwg.mxu0
    %vm441 = vcmask 261120
    %442 = vst.msk [vmem:[#allocation5] sm:$0xff] %vm441, %v436
    // Predicated region
    $region34: #{tpu_custom_call.1} parent=1 // pred_check
      _
    $region35: #{tpu_custom_call.1} parent=1 // pred_check_branch
      %444 = sbr.rel (0) target = $region37
    $region36: #{tpu_custom_call.1} parent=1 // pred_region
      %s446 = ssub.s32 128, 128
      %447 = vsyncadd [#allocation4], %s446
      %s449 = sshll.u32 [#allocation5], 4
      %s450 = int_to_ptr.vmem [resolvable:$true] %s449
      %452 = dma.vmem_to_hbm [thread:$0]  %s450, 128, %s7, [#allocation4]
    $region37: #{tpu_custom_call.1} parent=1 // pred_fallthru
      _
    // Predicated region
    $region38: #{tpu_custom_call.1} parent=1 // pred_check
      _
    $region39: #{tpu_custom_call.1} parent=1 // pred_check_branch
      %454 = sbr.rel (0) target = $region41
    $region40: #{tpu_custom_call.1} parent=1 // pred_region
      %455 = dma.done [#allocation4], 128
    $region41: #{tpu_custom_call.1} parent=1 // pred_fallthru
      _
    %456 = vsyncpa [#allocation3], 1
    %457 = vsyncpa [#allocation4], 1

</llo_original>
